<compile_context>
chip_gen: v5e
topology: v5e:2x2
jax: 0.10.0
libtpu: 0.0.40
codegen_flags: <defaults>
</compile_context>

<pallas_src>
import math

import jax
import jax.numpy as jnp
from jax.experimental import pallas as pl
from jax.experimental.pallas import tpu as pltpu

K = 3      # depthwise kernel size (module default)
PAD = 1    # padding (module default), stride = 1


def _choose_row_tile(H, W):
    """Pick TH so TH*W is a multiple of 128 (lane-dense blocks) and TH | H."""
    g = math.gcd(128, W)
    th = 128 // g
    if H % th != 0:
        return H  # fallback: one row tile per image (still correct, just untiled)
    # Grow the tile to amortise per-step overhead, but keep >= 2 row tiles so the
    # pipeline has something to overlap with, and keep blocks modest.
    while H % (2 * th) == 0 and H // (2 * th) >= 2 and (2 * th) * W <= 1024:
        th *= 2
    return th


def _make_sconv_kernel(W, k_size, use_mxu):
    def kernel(x_ref, wmask_ref, wpw_ref, bdw_ref, bpw_ref, out_ref):
        # x_ref    : (1, 1, C_in, (TH+4)*W)  halo'd row window, rows flattened on lanes
        # wmask_ref: (K, K, C_in, TH*W)      tap weights pre-multiplied by W-edge masks
        # wpw_ref  : (C_out, C_in)           pointwise weights
        # bdw_ref  : (C_in, 1)               depthwise bias
        # bpw_ref  : (C_out, 1)              pointwise bias
        # out_ref  : (1, C_out, TH*W)        lane-dense NCHW output tile
        c_in = x_ref.shape[2]
        c_out = out_ref.shape[1]
        thw = out_ref.shape[2]

        # ---- depthwise 3x3: 9 shifted flat taps, streamed from the ref ----
        acc = jnp.zeros((c_in, thw), jnp.float32)
        for dy in range(k_size):
            for dx in range(k_size):
                s = (dy + 1) * W + (dx - 1)                     # static lane offset
                xs = x_ref[0, 0, :, s:s + thw].astype(jnp.float32)
                acc = acc + xs * wmask_ref[dy, dx]              # (C_in, THW)
        acc = acc + bdw_ref[...]                                # (C_in, 1) broadcast

        # ---- pointwise 1x1 ----
        if use_mxu:
            out = jnp.dot(wpw_ref[...].astype(jnp.float32), acc,
                          preferred_element_type=jnp.float32)
        else:
            # Tiny channel counts: skip the MXU, do C_out broadcast FMAs on the VPU.
            wpw = wpw_ref[...].astype(jnp.float32)              # (C_out, C_in)
            out = jnp.zeros((c_out, thw), jnp.float32)
            for ci in range(c_in):
                out = out + wpw[:, ci:ci + 1] * acc[ci:ci + 1, :]
        out = out + bpw_ref[...]                                # (C_out, 1) broadcast

        out_ref[0] = out.astype(out_ref.dtype)
    return kernel


def s_conv(x, w_dw, b_dw, w_pw, b_pw):
    """Separable conv forward matching the PyTorch module (NCHW in / NCHW out).

    x    : (N, C_in, H, W)
    w_dw : (C_in, 1, 3, 3)     depthwise weight (PyTorch layout)
    b_dw : (C_in,)
    w_pw : (C_out, C_in, 1, 1) pointwise weight (PyTorch layout)
    b_pw : (C_out,)
    """
    N, C_in, H, W = x.shape
    C_out = w_pw.shape[0]
    assert w_dw.shape == (C_in, 1, K, K)
    assert w_pw.shape == (C_out, C_in, 1, 1)

    TH = _choose_row_tile(H, W)
    n_h = H // TH
    thw = TH * W
    win_rows = TH + 4            # TH+2 input rows for the taps, +2 so the +/-1 flat
    win_len = win_rows * W       # column shifts never leave the window.

    # ---- glue: one fused pad + halo-window gather pass (no transposes on output) ----
    x_pad = jnp.pad(x, ((0, 0), (0, 0), (2, 2), (0, 0)))          # zero-pad rows only
    row_idx = (jnp.arange(n_h) * TH)[:, None] + jnp.arange(win_rows)[None, :]
    x_win = x_pad[:, :, row_idx, :]                                # (N, C_in, n_h, TH+4, W)
    x_win = jnp.transpose(x_win, (0, 2, 1, 3, 4)).reshape(N, n_h, C_in, win_len)

    # ---- parameter prep (tiny) ----
    f32 = jnp.float32
    col = jnp.arange(thw, dtype=jnp.int32) % W
    masks = jnp.stack([(col >= 1).astype(f32),        # dx = 0 : needs x-1 >= 0
                       jnp.ones((thw,), f32),         # dx = 1
                       (col <= W - 2).astype(f32)],   # dx = 2 : needs x+1 <  W
                      axis=0)                         # (3, THW)
    wk = w_dw[:, 0, :, :].astype(f32)                 # (C_in, K, K)
    wmask = wk.transpose(1, 2, 0)[:, :, :, None] * masks[None, :, None, :]  # (K,K,C_in,THW)
    wpw2 = w_pw[:, :, 0, 0].astype(f32)               # (C_out, C_in)
    bdw2 = b_dw.astype(f32).reshape(C_in, 1)
    bpw2 = b_pw.astype(f32).reshape(C_out, 1)

    use_mxu = C_in > 32
    kernel = _make_sconv_kernel(W=W, k_size=K, use_mxu=use_mxu)

    itemsize = jnp.dtype(x.dtype).itemsize
    blk_bytes = (C_in * win_len * itemsize + K * K * C_in * thw * 4
                 + C_out * thw * itemsize + (C_out * C_in + C_in + C_out) * 4)
    vmem_limit = int(min(48 * 2 ** 20, max(4 * 2 ** 20, 4 * blk_bytes)))

    out_flat = pl.pallas_call(
        kernel,
        out_shape=jax.ShapeDtypeStruct((N, C_out, H * W), x.dtype),
        grid=(N, n_h),
        in_specs=[
            pl.BlockSpec((1, 1, C_in, win_len), lambda n, h: (n, h, 0, 0)),
            pl.BlockSpec((K, K, C_in, thw), lambda n, h: (0, 0, 0, 0)),
            pl.BlockSpec((C_out, C_in), lambda n, h: (0, 0)),
            pl.BlockSpec((C_in, 1), lambda n, h: (0, 0)),
            pl.BlockSpec((C_out, 1), lambda n, h: (0, 0)),
        ],
        out_specs=pl.BlockSpec((1, C_out, thw), lambda n, h: (n, 0, h)),
        compiler_params=pltpu.CompilerParams(
            dimension_semantics=("parallel", "parallel"),
            vmem_limit_bytes=vmem_limit),
    )(x_win, wmask, wpw2, bdw2, bpw2)

    return out_flat.reshape(N, C_out, H, W)


def _reference(x, w_dw, b_dw, w_pw, b_pw):
    """Pure-JAX reference using lax.conv_general_dilated (NCHW, like PyTorch)."""
    c_in = x.shape[1]
    dw = jax.lax.conv_general_dilated(
        x, w_dw, window_strides=(1, 1), padding=((PAD, PAD), (PAD, PAD)),
        feature_group_count=c_in,
        dimension_numbers=("NCHW", "OIHW", "NCHW"))
    dw = dw + b_dw.reshape(1, -1, 1, 1)
    pw = jax.lax.conv_general_dilated(
        dw, w_pw, window_strides=(1, 1), padding=((0, 0), (0, 0)),
        dimension_numbers=("NCHW", "OIHW", "NCHW"))
    return pw + b_pw.reshape(1, -1, 1, 1)


if __name__ == "__main__":
    # Small shapes consistent with the module: N=2, C_in=4, C_out=8, 16x16.
    N, C_in, C_out, H, W = 2, 4, 8, 16, 16

    key = jax.random.PRNGKey(0)
    kx, k1, k2, k3, k4 = jax.random.split(key, 5)

    x = jax.random.normal(kx, (N, C_in, H, W), jnp.float32)

    # Deterministic parameter init (uniform, roughly matching Conv2d fan-in scale).
    bound_dw = 1.0 / (1 * K * K) ** 0.5
    w_dw = jax.random.uniform(k1, (C_in, 1, K, K), jnp.float32, -bound_dw, bound_dw)
    b_dw = jax.random.uniform(k2, (C_in,), jnp.float32, -bound_dw, bound_dw)

    bound_pw = 1.0 / (C_in * 1 * 1) ** 0.5
    w_pw = jax.random.uniform(k3, (C_out, C_in, 1, 1), jnp.float32, -bound_pw, bound_pw)
    b_pw = jax.random.uniform(k4, (C_out,), jnp.float32, -bound_pw, bound_pw)

    out = s_conv(x, w_dw, b_dw, w_pw, b_pw)
    out = jax.block_until_ready(out)

    ref = _reference(x, w_dw, b_dw, w_pw, b_pw)
    assert out.shape == (N, C_out, H, W), out.shape
    err = float(jnp.max(jnp.abs(out - ref)))
    assert jnp.allclose(out, ref, atol=1e-4, rtol=1e-4), err

    print("KERNEL_OK")
</pallas_src>

<mosaic_0001>
module attributes {stable_mosaic.version = 11 : i64} {
  func.func @kernel(%arg0: i32, %arg1: i32, %arg2: memref<1x1x4x192xf32, #tpu.memory_space<vmem>>, %arg3: memref<3x3x4x128xf32, #tpu.memory_space<vmem>>, %arg4: memref<8x4xf32, #tpu.memory_space<vmem>>, %arg5: memref<4x1xf32, #tpu.memory_space<vmem>>, %arg6: memref<8x1xf32, #tpu.memory_space<vmem>>, %arg7: memref<1x8x128xf32, #tpu.memory_space<vmem>>) attributes {dimension_semantics = [#tpu.dimension_semantics<parallel>, #tpu.dimension_semantics<parallel>], iteration_bounds = array<i64: 2, 2>, scalar_prefetch = 0 : i64, scratch_operands = 0 : i64, tpu.core_type = #tpu.core_type<tc>, window_params = [{transform_indices = @transform_0, window_bounds = array<i64: 1, 1, 4, 192>}, {pipeline_mode = #tpu.pipeline_mode<synchronous>, transform_indices = @transform_1, window_bounds = array<i64: 3, 3, 4, 128>}, {pipeline_mode = #tpu.pipeline_mode<synchronous>, transform_indices = @transform_2, window_bounds = array<i64: 8, 4>}, {pipeline_mode = #tpu.pipeline_mode<synchronous>, transform_indices = @transform_3, window_bounds = array<i64: 4, 1>}, {pipeline_mode = #tpu.pipeline_mode<synchronous>, transform_indices = @transform_4, window_bounds = array<i64: 8, 1>}, {transform_indices = @transform_5, window_bounds = array<i64: 1, 8, 128>}]} {
    %cst = arith.constant 0.000000e+00 : f32
    %0 = vector.broadcast %cst : f32 to vector<4x128xf32>
    %c0 = arith.constant 0 : index
    %c0_0 = arith.constant 0 : index
    %c0_1 = arith.constant 0 : index
    %c15 = arith.constant 15 : index
    %1 = vector.load %arg2[%c0, %c0_0, %c0_1, %c15] : memref<1x1x4x192xf32, #tpu.memory_space<vmem>>, vector<1x1x4x128xf32>
    %2 = vector.shape_cast %1 : vector<1x1x4x128xf32> to vector<4x128xf32>
    %c0_2 = arith.constant 0 : index
    %c0_3 = arith.constant 0 : index
    %c0_4 = arith.constant 0 : index
    %c0_5 = arith.constant 0 : index
    %3 = vector.load %arg3[%c0_2, %c0_3, %c0_4, %c0_5] : memref<3x3x4x128xf32, #tpu.memory_space<vmem>>, vector<1x1x4x128xf32>
    %4 = vector.shape_cast %3 : vector<1x1x4x128xf32> to vector<4x128xf32>
    %5 = arith.mulf %2, %4 : vector<4x128xf32>
    %6 = arith.addf %0, %5 : vector<4x128xf32>
    %c0_6 = arith.constant 0 : index
    %c0_7 = arith.constant 0 : index
    %c0_8 = arith.constant 0 : index
    %c16 = arith.constant 16 : index
    %7 = vector.load %arg2[%c0_6, %c0_7, %c0_8, %c16] : memref<1x1x4x192xf32, #tpu.memory_space<vmem>>, vector<1x1x4x128xf32>
    %8 = vector.shape_cast %7 : vector<1x1x4x128xf32> to vector<4x128xf32>
    %c0_9 = arith.constant 0 : index
    %c1 = arith.constant 1 : index
    %c0_10 = arith.constant 0 : index
    %c0_11 = arith.constant 0 : index
    %9 = vector.load %arg3[%c0_9, %c1, %c0_10, %c0_11] : memref<3x3x4x128xf32, #tpu.memory_space<vmem>>, vector<1x1x4x128xf32>
    %10 = vector.shape_cast %9 : vector<1x1x4x128xf32> to vector<4x128xf32>
    %11 = arith.mulf %8, %10 : vector<4x128xf32>
    %12 = arith.addf %6, %11 : vector<4x128xf32>
    %c0_12 = arith.constant 0 : index
    %c0_13 = arith.constant 0 : index
    %c0_14 = arith.constant 0 : index
    %c17 = arith.constant 17 : index
    %13 = vector.load %arg2[%c0_12, %c0_13, %c0_14, %c17] : memref<1x1x4x192xf32, #tpu.memory_space<vmem>>, vector<1x1x4x128xf32>
    %14 = vector.shape_cast %13 : vector<1x1x4x128xf32> to vector<4x128xf32>
    %c0_15 = arith.constant 0 : index
    %c2 = arith.constant 2 : index
    %c0_16 = arith.constant 0 : index
    %c0_17 = arith.constant 0 : index
    %15 = vector.load %arg3[%c0_15, %c2, %c0_16, %c0_17] : memref<3x3x4x128xf32, #tpu.memory_space<vmem>>, vector<1x1x4x128xf32>
    %16 = vector.shape_cast %15 : vector<1x1x4x128xf32> to vector<4x128xf32>
    %17 = arith.mulf %14, %16 : vector<4x128xf32>
    %18 = arith.addf %12, %17 : vector<4x128xf32>
    %c0_18 = arith.constant 0 : index
    %c0_19 = arith.constant 0 : index
    %c0_20 = arith.constant 0 : index
    %c31 = arith.constant 31 : index
    %19 = vector.load %arg2[%c0_18, %c0_19, %c0_20, %c31] : memref<1x1x4x192xf32, #tpu.memory_space<vmem>>, vector<1x1x4x128xf32>
    %20 = vector.shape_cast %19 : vector<1x1x4x128xf32> to vector<4x128xf32>
    %c1_21 = arith.constant 1 : index
    %c0_22 = arith.constant 0 : index
    %c0_23 = arith.constant 0 : index
    %c0_24 = arith.constant 0 : index
    %21 = vector.load %arg3[%c1_21, %c0_22, %c0_23, %c0_24] : memref<3x3x4x128xf32, #tpu.memory_space<vmem>>, vector<1x1x4x128xf32>
    %22 = vector.shape_cast %21 : vector<1x1x4x128xf32> to vector<4x128xf32>
    %23 = arith.mulf %20, %22 : vector<4x128xf32>
    %24 = arith.addf %18, %23 : vector<4x128xf32>
    %c0_25 = arith.constant 0 : index
    %c0_26 = arith.constant 0 : index
    %c0_27 = arith.constant 0 : index
    %c32 = arith.constant 32 : index
    %25 = vector.load %arg2[%c0_25, %c0_26, %c0_27, %c32] : memref<1x1x4x192xf32, #tpu.memory_space<vmem>>, vector<1x1x4x128xf32>
    %26 = vector.shape_cast %25 : vector<1x1x4x128xf32> to vector<4x128xf32>
    %c1_28 = arith.constant 1 : index
    %c1_29 = arith.constant 1 : index
    %c0_30 = arith.constant 0 : index
    %c0_31 = arith.constant 0 : index
    %27 = vector.load %arg3[%c1_28, %c1_29, %c0_30, %c0_31] : memref<3x3x4x128xf32, #tpu.memory_space<vmem>>, vector<1x1x4x128xf32>
    %28 = vector.shape_cast %27 : vector<1x1x4x128xf32> to vector<4x128xf32>
    %29 = arith.mulf %26, %28 : vector<4x128xf32>
    %30 = arith.addf %24, %29 : vector<4x128xf32>
    %c0_32 = arith.constant 0 : index
    %c0_33 = arith.constant 0 : index
    %c0_34 = arith.constant 0 : index
    %c33 = arith.constant 33 : index
    %31 = vector.load %arg2[%c0_32, %c0_33, %c0_34, %c33] : memref<1x1x4x192xf32, #tpu.memory_space<vmem>>, vector<1x1x4x128xf32>
    %32 = vector.shape_cast %31 : vector<1x1x4x128xf32> to vector<4x128xf32>
    %c1_35 = arith.constant 1 : index
    %c2_36 = arith.constant 2 : index
    %c0_37 = arith.constant 0 : index
    %c0_38 = arith.constant 0 : index
    %33 = vector.load %arg3[%c1_35, %c2_36, %c0_37, %c0_38] : memref<3x3x4x128xf32, #tpu.memory_space<vmem>>, vector<1x1x4x128xf32>
    %34 = vector.shape_cast %33 : vector<1x1x4x128xf32> to vector<4x128xf32>
    %35 = arith.mulf %32, %34 : vector<4x128xf32>
    %36 = arith.addf %30, %35 : vector<4x128xf32>
    %c0_39 = arith.constant 0 : index
    %c0_40 = arith.constant 0 : index
    %c0_41 = arith.constant 0 : index
    %c47 = arith.constant 47 : index
    %37 = vector.load %arg2[%c0_39, %c0_40, %c0_41, %c47] : memref<1x1x4x192xf32, #tpu.memory_space<vmem>>, vector<1x1x4x128xf32>
    %38 = vector.shape_cast %37 : vector<1x1x4x128xf32> to vector<4x128xf32>
    %c2_42 = arith.constant 2 : index
    %c0_43 = arith.constant 0 : index
    %c0_44 = arith.constant 0 : index
    %c0_45 = arith.constant 0 : index
    %39 = vector.load %arg3[%c2_42, %c0_43, %c0_44, %c0_45] : memref<3x3x4x128xf32, #tpu.memory_space<vmem>>, vector<1x1x4x128xf32>
    %40 = vector.shape_cast %39 : vector<1x1x4x128xf32> to vector<4x128xf32>
    %41 = arith.mulf %38, %40 : vector<4x128xf32>
    %42 = arith.addf %36, %41 : vector<4x128xf32>
    %c0_46 = arith.constant 0 : index
    %c0_47 = arith.constant 0 : index
    %c0_48 = arith.constant 0 : index
    %c48 = arith.constant 48 : index
    %43 = vector.load %arg2[%c0_46, %c0_47, %c0_48, %c48] : memref<1x1x4x192xf32, #tpu.memory_space<vmem>>, vector<1x1x4x128xf32>
    %44 = vector.shape_cast %43 : vector<1x1x4x128xf32> to vector<4x128xf32>
    %c2_49 = arith.constant 2 : index
    %c1_50 = arith.constant 1 : index
    %c0_51 = arith.constant 0 : index
    %c0_52 = arith.constant 0 : index
    %45 = vector.load %arg3[%c2_49, %c1_50, %c0_51, %c0_52] : memref<3x3x4x128xf32, #tpu.memory_space<vmem>>, vector<1x1x4x128xf32>
    %46 = vector.shape_cast %45 : vector<1x1x4x128xf32> to vector<4x128xf32>
    %47 = arith.mulf %44, %46 : vector<4x128xf32>
    %48 = arith.addf %42, %47 : vector<4x128xf32>
    %c0_53 = arith.constant 0 : index
    %c0_54 = arith.constant 0 : index
    %c0_55 = arith.constant 0 : index
    %c49 = arith.constant 49 : index
    %49 = vector.load %arg2[%c0_53, %c0_54, %c0_55, %c49] : memref<1x1x4x192xf32, #tpu.memory_space<vmem>>, vector<1x1x4x128xf32>
    %50 = vector.shape_cast %49 : vector<1x1x4x128xf32> to vector<4x128xf32>
    %c2_56 = arith.constant 2 : index
    %c2_57 = arith.constant 2 : index
    %c0_58 = arith.constant 0 : index
    %c0_59 = arith.constant 0 : index
    %51 = vector.load %arg3[%c2_56, %c2_57, %c0_58, %c0_59] : memref<3x3x4x128xf32, #tpu.memory_space<vmem>>, vector<1x1x4x128xf32>
    %52 = vector.shape_cast %51 : vector<1x1x4x128xf32> to vector<4x128xf32>
    %53 = arith.mulf %50, %52 : vector<4x128xf32>
    %54 = arith.addf %48, %53 : vector<4x128xf32>
    %c0_60 = arith.constant 0 : index
    %c0_61 = arith.constant 0 : index
    %55 = vector.load %arg5[%c0_60, %c0_61] : memref<4x1xf32, #tpu.memory_space<vmem>>, vector<4x1xf32>
    %56 = vector.broadcast %55 : vector<4x1xf32> to vector<4x128xf32>
    %57 = arith.addf %54, %56 : vector<4x128xf32>
    %c0_62 = arith.constant 0 : index
    %c0_63 = arith.constant 0 : index
    %58 = vector.load %arg4[%c0_62, %c0_63] : memref<8x4xf32, #tpu.memory_space<vmem>>, vector<8x4xf32>
    %cst_64 = arith.constant 0.000000e+00 : f32
    %59 = vector.broadcast %cst_64 : f32 to vector<8x128xf32>
    %60 = vector.extract_strided_slice %58 {offsets = [0, 0], sizes = [8, 1], strides = [1, 1]} : vector<8x4xf32> to vector<8x1xf32>
    %61 = vector.extract_strided_slice %57 {offsets = [0, 0], sizes = [1, 128], strides = [1, 1]} : vector<4x128xf32> to vector<1x128xf32>
    %62 = vector.broadcast %60 : vector<8x1xf32> to vector<8x128xf32>
    %63 = vector.broadcast %61 : vector<1x128xf32> to vector<8x128xf32>
    %64 = arith.mulf %62, %63 : vector<8x128xf32>
    %65 = arith.addf %59, %64 : vector<8x128xf32>
    %66 = vector.extract_strided_slice %58 {offsets = [0, 1], sizes = [8, 1], strides = [1, 1]} : vector<8x4xf32> to vector<8x1xf32>
    %67 = vector.extract_strided_slice %57 {offsets = [1, 0], sizes = [1, 128], strides = [1, 1]} : vector<4x128xf32> to vector<1x128xf32>
    %68 = vector.broadcast %66 : vector<8x1xf32> to vector<8x128xf32>
    %69 = vector.broadcast %67 : vector<1x128xf32> to vector<8x128xf32>
    %70 = arith.mulf %68, %69 : vector<8x128xf32>
    %71 = arith.addf %65, %70 : vector<8x128xf32>
    %72 = vector.extract_strided_slice %58 {offsets = [0, 2], sizes = [8, 1], strides = [1, 1]} : vector<8x4xf32> to vector<8x1xf32>
    %73 = vector.extract_strided_slice %57 {offsets = [2, 0], sizes = [1, 128], strides = [1, 1]} : vector<4x128xf32> to vector<1x128xf32>
    %74 = vector.broadcast %72 : vector<8x1xf32> to vector<8x128xf32>
    %75 = vector.broadcast %73 : vector<1x128xf32> to vector<8x128xf32>
    %76 = arith.mulf %74, %75 : vector<8x128xf32>
    %77 = arith.addf %71, %76 : vector<8x128xf32>
    %78 = vector.extract_strided_slice %58 {offsets = [0, 3], sizes = [8, 1], strides = [1, 1]} : vector<8x4xf32> to vector<8x1xf32>
    %79 = vector.extract_strided_slice %57 {offsets = [3, 0], sizes = [1, 128], strides = [1, 1]} : vector<4x128xf32> to vector<1x128xf32>
    %80 = vector.broadcast %78 : vector<8x1xf32> to vector<8x128xf32>
    %81 = vector.broadcast %79 : vector<1x128xf32> to vector<8x128xf32>
    %82 = arith.mulf %80, %81 : vector<8x128xf32>
    %83 = arith.addf %77, %82 : vector<8x128xf32>
    %c0_65 = arith.constant 0 : index
    %c0_66 = arith.constant 0 : index
    %84 = vector.load %arg6[%c0_65, %c0_66] : memref<8x1xf32, #tpu.memory_space<vmem>>, vector<8x1xf32>
    %85 = vector.broadcast %84 : vector<8x1xf32> to vector<8x128xf32>
    %86 = arith.addf %83, %85 : vector<8x128xf32>
    %c0_67 = arith.constant 0 : index
    %c0_68 = arith.constant 0 : index
    %c0_69 = arith.constant 0 : index
    %87 = vector.load %arg7[%c0_67, %c0_68, %c0_69] : memref<1x8x128xf32, #tpu.memory_space<vmem>>, vector<1x8x128xf32>
    %88 = vector.shape_cast %87 : vector<1x8x128xf32> to vector<8x128xf32>
    %89 = vector.shape_cast %86 : vector<8x128xf32> to vector<1x8x128xf32>
    tpu.vector_store %arg7[%c0_67, %c0_68, %c0_69], %89 {strides = array<i32>} : memref<1x8x128xf32, #tpu.memory_space<vmem>>, vector<1x8x128xf32>,
    return
  }
  func.func @transform_0(%arg0: i32, %arg1: i32) -> (i32, i32, i32, i32) {
    %c0_i32 = arith.constant 0 : i32
    %c0_i32_0 = arith.constant 0 : i32
    %c0_i32_1 = arith.constant 0 : i32
    return %arg0, %arg1, %c0_i32, %c0_i32_0 : i32, i32, i32, i32
  }
  func.func @transform_1(%arg0: i32, %arg1: i32) -> (i32, i32, i32, i32) {
    %c0_i32 = arith.constant 0 : i32
    %c0_i32_0 = arith.constant 0 : i32
    %c0_i32_1 = arith.constant 0 : i32
    %c0_i32_2 = arith.constant 0 : i32
    %c0_i32_3 = arith.constant 0 : i32
    return %c0_i32, %c0_i32_0, %c0_i32_1, %c0_i32_2 : i32, i32, i32, i32
  }
  func.func @transform_2(%arg0: i32, %arg1: i32) -> (i32, i32) {
    %c0_i32 = arith.constant 0 : i32
    %c0_i32_0 = arith.constant 0 : i32
    %c0_i32_1 = arith.constant 0 : i32
    return %c0_i32, %c0_i32_0 : i32, i32
  }
  func.func @transform_3(%arg0: i32, %arg1: i32) -> (i32, i32) {
    %c0_i32 = arith.constant 0 : i32
    %c0_i32_0 = arith.constant 0 : i32
    %c0_i32_1 = arith.constant 0 : i32
    return %c0_i32, %c0_i32_0 : i32, i32
  }
  func.func @transform_4(%arg0: i32, %arg1: i32) -> (i32, i32) {
    %c0_i32 = arith.constant 0 : i32
    %c0_i32_0 = arith.constant 0 : i32
    %c0_i32_1 = arith.constant 0 : i32
    return %c0_i32, %c0_i32_0 : i32, i32
  }
  func.func @transform_5(%arg0: i32, %arg1: i32) -> (i32, i32, i32) {
    %c0_i32 = arith.constant 0 : i32
    %c0_i32_0 = arith.constant 0 : i32
    return %arg0, %c0_i32, %arg1 : i32, i32, i32
  }
}

</mosaic_0001>

<llo_original>
// kernel: tpu_custom_call.1
$region0: #{tpu_custom_call.1}
  #allocation0 [shape = 'u32[]', space=smem, size = 0x4, offset = 0x4, fixed_abs, tag = 'smem constant byte address 0x4 - core index']
  #allocation1 [shape = 'u32[72,128]{1,0:T(1,128)}', space=vmem, size = 0x9000, scoped, tag = 'internal scratch']
  %s0 = inlined_call_operand.hbm [shape: f32[2,2,4,192], index: 0, kind: input, shape index: {}]
  %s1 = inlined_call_operand.hbm [shape: f32[3,3,4,128], index: 1, kind: input, shape index: {}]
  %s2 = inlined_call_operand.vmem [shape: f32[8,4], index: 2, kind: input, shape index: {}]
  %s3 = inlined_call_operand.vmem [shape: f32[4,1], index: 3, kind: input, shape index: {}]
  %s4 = inlined_call_operand.vmem [shape: f32[8,1], index: 4, kind: input, shape index: {}]
  %s5 = inlined_call_operand.hbm [shape: f32[2,8,256], index: 5, kind: output, shape index: {}]
  %s6 = sld [smem:[#allocation0]]
  $region61: #{tpu_custom_call.1} parent=0
    _
  %s8 = ssub.s32 1, %s6
  %s9 = scalar_select 0, %s8, %s6
  $region1: #{tpu_custom_call.1} parent=0
    #allocation2 [shape = 'u8[8192]{0}', space=vmem, size = 0x2000, scoped, tag = 'input window, operand 0']
    #allocation3 [shape = 's32[2]{0}', space=sflag, size = 0x8, scoped, tag = 'scoped memory for tpu_custom_call.1']
    #allocation4 [shape = 's32[2]{0}', space=sflag, size = 0x8, scoped, tag = 'scoped memory for tpu_custom_call.1']
    #allocation5 [shape = 'u8[18432]{0}', space=vmem, size = 0x4800, scoped, tag = 'input window, operand 1, single buffered']
    #allocation6 [shape = 's32[1]{0}', space=sflag, size = 0x4, scoped, tag = 'scoped memory for tpu_custom_call.1']
    #allocation7 [shape = 'u8[8192]{0}', space=vmem, size = 0x2000, scoped, tag = 'output window, operand 0']
    %10 = vsyncpa [#allocation3], 0
    %s11 = scalar_lea.sflag [#allocation3], 1
    %12 = vsyncpa %s11, 0
    %13 = vsyncpa [#allocation6], 0
    %14 = vsyncpa [#allocation4], 0
    %s15 = scalar_lea.sflag [#allocation4], 1
    %16 = vsyncpa %s15, 0
    loop: start=0, step=1, limit=6
    $region2: #{tpu_custom_call.1} parent=1 // loop_pre_header
      _
    $region3: #{tpu_custom_call.1} parent=1 // loop_header
      %s18 = sphi 0, %s22
      %p19 = scmp.ge.s32.totalorder %s18, 6
      %s25 = sphi 0, %s37
      %s26 = sphi 0, %s33
      %s27 = sphi 0, %s25
      %s28 = sphi 0, %s26
      %s29 = sphi 0, %s27
      %s30 = sphi 0, %s28
      %s42 = sphi 0, %s44
      %s45 = sphi 0, %s42
      %s46 = sphi 0, %s45
      %s62 = sphi 0, %s46
      %s66 = sphi 0, %s66
      %s68 = sphi 0, %s66
      %s69 = sphi 0, %s68
      %s83 = sphi 0, %s69
      %s87 = sphi 0, %s87
      %s89 = sphi 0, %s87
      %s90 = sphi 0, %s89
      %s104 = sphi 0, %s90
      %s108 = sphi 0, %s108
      %s110 = sphi 0, %s108
      %s111 = sphi 0, %s110
      %s125 = sphi 0, %s111
      %s129 = sphi 0, %s129
      %s131 = sphi 0, %s129
      %s132 = sphi 0, %s131
      %s146 = sphi 0, %s132
      %s154 = sphi 0, %s156
      %s157 = sphi 0, %s154
      %s158 = sphi 0, %s157
      %s174 = sphi 0, %s158
    $region4: #{tpu_custom_call.1} parent=1 // loop_header_branch
      %21 = sbr.rel (%p19) target = $region8
    $region5: #{tpu_custom_call.1} parent=1 // loop_body
      %s23 = ssub.s32 %s18, 1
      %s24 = ssub.s32 %s18, 2
      %s31 = sadd.s32 1, %s26
      %p32 = scmp.ge.s32.totalorder %s31, 2
      %s33 = scalar_select %p32, 0, %s31
      %s34 = sadd.s32 1, %s25
      %s35 = scalar_select %p32, %s34, %s25
      %p36 = scmp.ge.s32.totalorder %s35, 2
      %s37 = scalar_select %p36, 0, %s35
      %s38 = ssub.s32 %s25, %s37
      %s39 = ssub.s32 %s26, %s33
      %s40 = sor.u32 %s38, %s39
      %p41 = scmp.eq.s32.totalorder %s40, 0
      %s43 = sadd.s32 %s42, 1
      %s44 = scalar_select %p41, %s42, %s43
      %p47 = pneg %p41
      %p48 = scmp.eq.s32.totalorder %s18, 3
      %p49 = por %p47, %p48
      %p50 = scmp.ne.s32.totalorder %s42, %s45
      %p51 = scmp.eq.s32.totalorder %s18, 0
      %p52 = por %p50, %p51
      %p53 = scmp.ne.s32.totalorder %s42, %s45
      %p54 = scmp.eq.s32.totalorder %s23, 3
      %p55 = por %p53, %p54
      %p56 = scmp.ne.s32.totalorder %s45, %s46
      %p57 = scmp.eq.s32.totalorder %s23, 0
      %p58 = por %p56, %p57
      %p59 = scmp.ne.s32.totalorder %s45, %s46
      %p60 = scmp.eq.s32.totalorder %s24, 3
      %p61 = por %p59, %p60
      %p63 = scmp.ne.s32.totalorder %s46, %s62
      %p64 = scmp.eq.s32.totalorder %s24, 0
      %p65 = por %p63, %p64
      %s67 = sadd.s32 %s66, 1
      %p70 = scmp.eq.s32.totalorder %s18, 3
      %p71 = scmp.ne.s32.totalorder %s66, %s68
      %p72 = scmp.eq.s32.totalorder %s18, 0
      %p73 = por %p71, %p72
      %p74 = scmp.ne.s32.totalorder %s66, %s68
      %p75 = scmp.eq.s32.totalorder %s23, 3
      %p76 = por %p74, %p75
      %p77 = scmp.ne.s32.totalorder %s68, %s69
      %p78 = scmp.eq.s32.totalorder %s23, 0
      %p79 = por %p77, %p78
      %p80 = scmp.ne.s32.totalorder %s68, %s69
      %p81 = scmp.eq.s32.totalorder %s24, 3
      %p82 = por %p80, %p81
      %p84 = scmp.ne.s32.totalorder %s69, %s83
      %p85 = scmp.eq.s32.totalorder %s24, 0
      %p86 = por %p84, %p85
      %s88 = sadd.s32 %s87, 1
      %p91 = scmp.eq.s32.totalorder %s18, 3
      %p92 = scmp.ne.s32.totalorder %s87, %s89
      %p93 = scmp.eq.s32.totalorder %s18, 0
      %p94 = por %p92, %p93
      %p95 = scmp.ne.s32.totalorder %s87, %s89
      %p96 = scmp.eq.s32.totalorder %s23, 3
      %p97 = por %p95, %p96
      %p98 = scmp.ne.s32.totalorder %s89, %s90
      %p99 = scmp.eq.s32.totalorder %s23, 0
      %p100 = por %p98, %p99
      %p101 = scmp.ne.s32.totalorder %s89, %s90
      %p102 = scmp.eq.s32.totalorder %s24, 3
      %p103 = por %p101, %p102
      %p105 = scmp.ne.s32.totalorder %s90, %s104
      %p106 = scmp.eq.s32.totalorder %s24, 0
      %p107 = por %p105, %p106
      %s109 = sadd.s32 %s108, 1
      %p112 = scmp.eq.s32.totalorder %s18, 3
      %p113 = scmp.ne.s32.totalorder %s108, %s110
      %p114 = scmp.eq.s32.totalorder %s18, 0
      %p115 = por %p113, %p114
      %p116 = scmp.ne.s32.totalorder %s108, %s110
      %p117 = scmp.eq.s32.totalorder %s23, 3
      %p118 = por %p116, %p117
      %p119 = scmp.ne.s32.totalorder %s110, %s111
      %p120 = scmp.eq.s32.totalorder %s23, 0
      %p121 = por %p119, %p120
      %p122 = scmp.ne.s32.totalorder %s110, %s111
      %p123 = scmp.eq.s32.totalorder %s24, 3
      %p124 = por %p122, %p123
      %p126 = scmp.ne.s32.totalorder %s111, %s125
      %p127 = scmp.eq.s32.totalorder %s24, 0
      %p128 = por %p126, %p127
      %s130 = sadd.s32 %s129, 1
      %p133 = scmp.eq.s32.totalorder %s18, 3
      %p134 = scmp.ne.s32.totalorder %s129, %s131
      %p135 = scmp.eq.s32.totalorder %s18, 0
      %p136 = por %p134, %p135
      %p137 = scmp.ne.s32.totalorder %s129, %s131
      %p138 = scmp.eq.s32.totalorder %s23, 3
      %p139 = por %p137, %p138
      %p140 = scmp.ne.s32.totalorder %s131, %s132
      %p141 = scmp.eq.s32.totalorder %s23, 0
      %p142 = por %p140, %p141
      %p143 = scmp.ne.s32.totalorder %s131, %s132
      %p144 = scmp.eq.s32.totalorder %s24, 3
      %p145 = por %p143, %p144
      %p147 = scmp.ne.s32.totalorder %s132, %s146
      %p148 = scmp.eq.s32.totalorder %s24, 0
      %p149 = por %p147, %p148
      %s150 = ssub.s32 %s25, %s37
      %s151 = ssub.s32 %s26, %s33
      %s152 = sor.u32 %s150, %s151
      %p153 = scmp.eq.s32.totalorder %s152, 0
      %s155 = sadd.s32 %s154, 1
      %s156 = scalar_select %p153, %s154, %s155
      %p159 = pneg %p153
      %p160 = scmp.eq.s32.totalorder %s18, 3
      %p161 = por %p159, %p160
      %p162 = scmp.ne.s32.totalorder %s154, %s157
      %p163 = scmp.eq.s32.totalorder %s18, 0
      %p164 = por %p162, %p163
      %p165 = scmp.ne.s32.totalorder %s154, %s157
      %p166 = scmp.eq.s32.totalorder %s23, 3
      %p167 = por %p165, %p166
      %p168 = scmp.ne.s32.totalorder %s157, %s158
      %p169 = scmp.eq.s32.totalorder %s23, 0
      %p170 = por %p168, %p169
      %p171 = scmp.ne.s32.totalorder %s157, %s158
      %p172 = scmp.eq.s32.totalorder %s24, 3
      %p173 = por %p171, %p172
      %p175 = scmp.ne.s32.totalorder %s158, %s174
      %p176 = scmp.eq.s32.totalorder %s24, 0
      %p177 = por %p175, %p176
      %p178 = scmp.le.s32.totalorder 1, %s18
      %p179 = scmp.lt.s32.totalorder %s18, 5
      %p180 = pnand %p178, %p179
      %p181 = pneg %p180
      // Predicated region
      $region9: #{tpu_custom_call.1} parent=5 // pred_check
        _
      $region10: #{tpu_custom_call.1} parent=5 // pred_check_branch
        %183 = sbr.rel (%p180) target = $region12
      $region11: #{tpu_custom_call.1} parent=5 // pred_region
        %s184 = ssub.s32 %s18, 1
        // Predicated region
        $region13: #{tpu_custom_call.1} parent=11 // pred_check
          %p185 = pneg %p79
        $region14: #{tpu_custom_call.1} parent=11 // pred_check_branch
          %187 = sbr.rel (%p185) target = $region16
        $region15: #{tpu_custom_call.1} parent=11 // pred_region
          %189 = vsyncadd [#allocation6], 0
          %s190 = sshll.u32 %s1, 4
          %s191 = int_to_ptr.hbm [resolvable:$true] %s190
          %s192 = sshll.u32 [#allocation5], 4
          %s193 = int_to_ptr.vmem [resolvable:$true] %s192
          %198 = dma.hbm_to_vmem [thread:$0]  %s191, 576, %s193, [#allocation6], 64, 64, 4
        $region16: #{tpu_custom_call.1} parent=11 // pred_fallthru
          _
        // Predicated region
        $region17: #{tpu_custom_call.1} parent=11 // pred_check
          %p199 = pneg %p100
        $region18: #{tpu_custom_call.1} parent=11 // pred_check_branch
          %201 = sbr.rel (%p199) target = $region20
        $region19: #{tpu_custom_call.1} parent=11 // pred_region
          _
        $region20: #{tpu_custom_call.1} parent=11 // pred_fallthru
          _
        // Predicated region
        $region21: #{tpu_custom_call.1} parent=11 // pred_check
          %p202 = pneg %p121
        $region22: #{tpu_custom_call.1} parent=11 // pred_check_branch
          %204 = sbr.rel (%p202) target = $region24
        $region23: #{tpu_custom_call.1} parent=11 // pred_region
          _
        $region24: #{tpu_custom_call.1} parent=11 // pred_fallthru
          _
        // Predicated region
        $region25: #{tpu_custom_call.1} parent=11 // pred_check
          %p205 = pneg %p142
        $region26: #{tpu_custom_call.1} parent=11 // pred_check_branch
          %207 = sbr.rel (%p205) target = $region28
        $region27: #{tpu_custom_call.1} parent=11 // pred_region
          _
        $region28: #{tpu_custom_call.1} parent=11 // pred_fallthru
          _
      $region12: #{tpu_custom_call.1} parent=5 // pred_fallthru
        _
      %p208 = scmp.lt.s32.totalorder %s18, 4
      // Predicated region
      $region29: #{tpu_custom_call.1} parent=5 // pred_check
        %p209 = pneg %p208
      $region30: #{tpu_custom_call.1} parent=5 // pred_check_branch
        %211 = sbr.rel (%p209) target = $region32
      $region31: #{tpu_custom_call.1} parent=5 // pred_region
        // Predicated region
        $region33: #{tpu_custom_call.1} parent=31 // pred_check
          %p212 = pneg %p52
        $region34: #{tpu_custom_call.1} parent=31 // pred_check_branch
          %214 = sbr.rel (%p212) target = $region36
        $region35: #{tpu_custom_call.1} parent=31 // pred_region
          %s215 = sand.u32 %s42, 1
          %s216 = scalar_lea.sflag [#allocation3], %s215
          %s217 = sand.u32 %s42, 1
          %s218 = smul.addr %s217, 8
          %s219 = scalar_lea.vmem [#allocation2], %s218
          %221 = vsyncadd %s216, 0
          %s222 = smul.addr %s26, 2
          %s223 = smul.addr %s25, 4
          %s224 = sadd.s32 %s222, %s223
          %s225 = smul.addr %s224, 4
          %s226 = scalar_lea.hbm %s0, %s225
          %s228 = sshll.u32 %s226, 4
          %s229 = int_to_ptr.hbm [resolvable:$true] %s228
          %s230 = sshll.u32 %s219, 4
          %s231 = int_to_ptr.vmem [resolvable:$true] %s230
          %233 = dma.hbm_to_vmem [thread:$0]  %s229, 128, %s231, %s216
        $region36: #{tpu_custom_call.1} parent=31 // pred_fallthru
          _
      $region32: #{tpu_custom_call.1} parent=5 // pred_fallthru
        _
      %p234 = scmp.le.s32.totalorder 1, %s18
      %p235 = scmp.lt.s32.totalorder %s18, 5
      %p236 = pnand %p234, %p235
      %p237 = pneg %p236
      // Predicated region
      $region37: #{tpu_custom_call.1} parent=5 // pred_check
        _
      $region38: #{tpu_custom_call.1} parent=5 // pred_check_branch
        %239 = sbr.rel (%p236) target = $region40
      $region39: #{tpu_custom_call.1} parent=5 // pred_region
        %s240 = ssub.s32 %s18, 1
        %s241 = sand.u32 %s45, 1
        %s242 = scalar_lea.sflag [#allocation3], %s241
        %s243 = sand.u32 %s45, 1
        %s244 = smul.addr %s243, 8
        %s245 = scalar_lea.vmem [#allocation2], %s244
        // Predicated region
        $region41: #{tpu_custom_call.1} parent=39 // pred_check
          %p246 = pneg %p58
        $region42: #{tpu_custom_call.1} parent=39 // pred_check_branch
          %248 = sbr.rel (%p246) target = $region44
        $region43: #{tpu_custom_call.1} parent=39 // pred_region
          %250 = dma.done %s242, 128
        $region44: #{tpu_custom_call.1} parent=39 // pred_fallthru
          _
        // Predicated region
        $region45: #{tpu_custom_call.1} parent=39 // pred_check
          %p251 = pneg %p79
        $region46: #{tpu_custom_call.1} parent=39 // pred_check_branch
          %253 = sbr.rel (%p251) target = $region48
        $region47: #{tpu_custom_call.1} parent=39 // pred_region
          %255 = dma.done [#allocation6], 576
        $region48: #{tpu_custom_call.1} parent=39 // pred_fallthru
          _
        %s256 = sand.u32 %s45, 1
        %s257 = scalar_lea.sflag [#allocation3], %s256
        %s258 = sand.u32 %s45, 1
        %s259 = smul.addr %s258, 8
        %s260 = scalar_lea.vmem [#allocation2], %s259
        %p261 = pneg %p58
        %p262 = pneg %p55
        %p263 = pneg %p79
        %p264 = pneg %p76
        %p265 = pneg %p100
        %p266 = pneg %p97
        %p267 = pneg %p121
        %p268 = pneg %p118
        %p269 = pneg %p142
        %p270 = pneg %p139
        %p271 = pneg %p170
        %p272 = pneg %p167
        %s273 = sand.u32 %s157, 1
        %s274 = scalar_lea.sflag [#allocation4], %s273
        %s275 = sand.u32 %s157, 1
        %s276 = smul.addr %s275, 8
        %s277 = scalar_lea.vmem [#allocation7], %s276
        %v278 = vld [vmem:[%s245] sm:$0xff]
        %v279 = vld [vmem:[#allocation5] sm:$0xf]
        %281 = vrot.lane.b32.xlu0 %v279, 15
        %v282 = vpop.permute.xlu0 %281
        %v283 = vrot.slane %v282, 4
        %vm284 = vcmask 121856
        %v285 = vsel %vm284, %v283, %v282
        %v287 = vmul.f32 %v278, %v285
        %v288 = vadd.f32 %v287, 0.0
        %s289 = scalar_lea.vmem [#allocation5], 4
        %v290 = vld [vmem:[%s289] sm:$0xf]
        %292 = vrot.lane.b32.xlu0 %v290, 16
        %v293 = vpop.permute.xlu0 %292
        %v294 = vrot.slane %v293, 4
        %vm295 = vcmask 130048
        %v296 = vsel %vm295, %v294, %v293
        %v298 = vmul.f32 %v278, %v296
        %300 = vrot.lane.b32.xlu0 %v298, 127
        %v301 = vpop.permute.xlu0 %300
        %v302 = vrot.slane %v301, 4
        %vm303 = vcmask 1039360
        %v304 = vsel %vm303, %v301, %v302
        %v306 = vadd.f32 %v288, %v304
        %s307 = scalar_lea.vmem [#allocation5], 8
        %v308 = vld [vmem:[%s307] sm:$0xf]
        %310 = vrot.lane.b32.xlu0 %v308, 17
        %v311 = vpop.permute.xlu0 %310
        %v312 = vrot.slane %v311, 4
        %vm313 = vcmask 138240
        %v314 = vsel %vm313, %v312, %v311
        %v316 = vmul.f32 %v278, %v314
        %318 = vrot.lane.b32.xlu0 %v316, 126
        %v319 = vpop.permute.xlu0 %318
        %v320 = vrot.slane %v319, 4
        %vm321 = vcmask 1031168
        %v322 = vsel %vm321, %v319, %v320
        %v324 = vadd.f32 %v306, %v322
        %s325 = scalar_lea.vmem [#allocation5], 12
        %v326 = vld [vmem:[%s325] sm:$0xf]
        %328 = vrot.lane.b32.xlu0 %v326, 31
        %v329 = vpop.permute.xlu0 %328
        %v330 = vrot.slane %v329, 4
        %vm331 = vcmask 252928
        %v332 = vsel %vm331, %v330, %v329
        %v334 = vmul.f32 %v278, %v332
        %336 = vrot.lane.b32.xlu0 %v334, 112
        %v337 = vpop.permute.xlu0 %336
        %v338 = vrot.slane %v337, 4
        %vm339 = vcmask 916480
        %v340 = vsel %vm339, %v337, %v338
        %v342 = vadd.f32 %v324, %v340
        %s343 = scalar_lea.vmem [#allocation5], 16
        %v344 = vld [vmem:[%s343] sm:$0xf]
        %346 = vrot.lane.b32.xlu0 %v344, 32
        %v347 = vpop.permute.xlu0 %346
        %v348 = vrot.slane %v347, 4
        %vm349 = vcmask 261120
        %v350 = vsel %vm349, %v348, %v347
        %v352 = vmul.f32 %v278, %v350
        %354 = vrot.lane.b32.xlu0 %v352, 111
        %v355 = vpop.permute.xlu0 %354
        %v356 = vrot.slane %v355, 4
        %vm357 = vcmask 908288
        %v358 = vsel %vm357, %v355, %v356
        %v360 = vadd.f32 %v342, %v358
        %s361 = scalar_lea.vmem [#allocation5], 20
        %v362 = vld [vmem:[%s361] sm:$0xf]
        %364 = vrot.lane.b32.xlu0 %v362, 33
        %v365 = vpop.permute.xlu0 %364
        %v366 = vrot.slane %v365, 4
        %vm367 = vcmask 269312
        %v368 = vsel %vm367, %v366, %v365
        %v370 = vmul.f32 %v278, %v368
        %372 = vrot.lane.b32.xlu0 %v370, 110
        %v373 = vpop.permute.xlu0 %372
        %v374 = vrot.slane %v373, 4
        %vm375 = vcmask 900096
        %v376 = vsel %vm375, %v373, %v374
        %v378 = vadd.f32 %v360, %v376
        %s379 = scalar_lea.vmem [#allocation5], 24
        %v380 = vld [vmem:[%s379] sm:$0xf]
        %382 = vrot.lane.b32.xlu0 %v380, 47
        %v383 = vpop.permute.xlu0 %382
        %v384 = vrot.slane %v383, 4
        %vm385 = vcmask 384000
        %v386 = vsel %vm385, %v384, %v383
        %v388 = vmul.f32 %v278, %v386
        %390 = vrot.lane.b32.xlu0 %v388, 96
        %v391 = vpop.permute.xlu0 %390
        %v392 = vrot.slane %v391, 4
        %vm393 = vcmask 785408
        %v394 = vsel %vm393, %v391, %v392
        %v396 = vadd.f32 %v378, %v394
        %s397 = scalar_lea.vmem [#allocation5], 28
        %v398 = vld [vmem:[%s397] sm:$0xf]
        %400 = vrot.lane.b32.xlu0 %v398, 48
        %v401 = vpop.permute.xlu0 %400
        %v402 = vrot.slane %v401, 4
        %vm403 = vcmask 392192
        %v404 = vsel %vm403, %v402, %v401
        %v406 = vmul.f32 %v278, %v404
        %408 = vrot.lane.b32.xlu0 %v406, 95
        %v409 = vpop.permute.xlu0 %408
        %v410 = vrot.slane %v409, 4
        %vm411 = vcmask 777216
        %v412 = vsel %vm411, %v409, %v410
        %v414 = vadd.f32 %v396, %v412
        %s415 = scalar_lea.vmem [#allocation5], 32
        %v416 = vld [vmem:[%s415] sm:$0xf]
        %418 = vrot.lane.b32.xlu0 %v416, 49
        %v419 = vpop.permute.xlu0 %418
        %v420 = vrot.slane %v419, 4
        %vm421 = vcmask 400384
        %v422 = vsel %vm421, %v420, %v419
        %v424 = vmul.f32 %v278, %v422
        %426 = vrot.lane.b32.xlu0 %v424, 94
        %v427 = vpop.permute.xlu0 %426
        %v428 = vrot.slane %v427, 4
        %vm429 = vcmask 769024
        %v430 = vsel %vm429, %v427, %v428
        %v432 = vadd.f32 %v414, %v430
        %v433 = vld [vmem:[%s3] sm:$0xf]
        %435 = vset.pattern.permute.xlu0 0
        %436 = vperm.xlu0 %435, %v433
        %v437 = vpop.permute.xlu0 %436
        %v439 = vadd.f32 %v432, %v437
        %v440 = vld [vmem:[%s2] sm:$0xff]
        %442 = vset.pattern.permute.xlu0 0
        %443 = vperm.xlu0 %442, %v440
        %v444 = vpop.permute.xlu0 %443
        %v447 = vperm.slane %v439, 0
        %v448 = vperm.slane %v439, 4
        %v451 = vperm.slane %v447, 0
        %v452 = vperm.slane %v448, 0
        %v453 = vmul.f32 %v444, %v451
        %v454 = vmul.f32 %v444, %v452
        %v455 = vadd.f32 %v453, 0.0
        %v456 = vadd.f32 %v454, 0.0
        %457 = vset.pattern.permute.xlu0 1
        %458 = vperm.xlu0 %457, %v440
        %v459 = vpop.permute.xlu0 %458
        %v461 = vperm.slane %v439, 1
        %v462 = vperm.slane %v439, 5
        %v465 = vperm.slane %v461, 1
        %v466 = vperm.slane %v462, 1
        %v467 = vmul.f32 %v459, %v465
        %v468 = vmul.f32 %v459, %v466
        %v469 = vadd.f32 %v455, %v467
        %v470 = vadd.f32 %v456, %v468
        %471 = vset.pattern.permute.xlu0 2
        %472 = vperm.xlu0 %471, %v440
        %v473 = vpop.permute.xlu0 %472
        %v475 = vperm.slane %v439, 2
        %v476 = vperm.slane %v439, 6
        %v479 = vperm.slane %v475, 2
        %v480 = vperm.slane %v476, 2
        %v481 = vmul.f32 %v473, %v479
        %v482 = vmul.f32 %v473, %v480
        %v483 = vadd.f32 %v469, %v481
        %v484 = vadd.f32 %v470, %v482
        %485 = vset.pattern.permute.xlu0 3
        %486 = vperm.xlu0 %485, %v440
        %v487 = vpop.permute.xlu0 %486
        %v489 = vperm.slane %v439, 3
        %v490 = vperm.slane %v439, 7
        %v493 = vperm.slane %v489, 3
        %v494 = vperm.slane %v490, 3
        %v495 = vmul.f32 %v487, %v493
        %v496 = vmul.f32 %v487, %v494
        %v497 = vadd.f32 %v483, %v495
        %v498 = vadd.f32 %v484, %v496
        %v499 = vld [vmem:[%s4] sm:$0xff]
        %501 = vset.pattern.permute.xlu0 0
        %502 = vperm.xlu0 %501, %v499
        %v503 = vpop.permute.xlu0 %502
        %v505 = vadd.f32 %v497, %v503
        %v506 = vadd.f32 %v498, %v503
        %509 = vrot.lane.b32.xlu0 %v505, 113
        %v510 = vpop.permute.xlu0 %509
        %511 = vrot.lane.b32.xlu0 %v506, 113
        %v512 = vpop.permute.xlu0 %511
        %vm513 = vcmask 924672
        %v514 = vsel %vm513, %v510, %v512
        %516 = vst [vmem:[%s277] sm:$0xff] %v514
        %s517 = sand.u32 %s157, 1
        %s518 = scalar_lea.sflag [#allocation4], %s517
        %s519 = sand.u32 %s157, 1
        %s520 = smul.addr %s519, 8
        %s521 = scalar_lea.vmem [#allocation7], %s520
        // Predicated region
        $region49: #{tpu_custom_call.1} parent=39 // pred_check
          %p522 = pneg %p167
        $region50: #{tpu_custom_call.1} parent=39 // pred_check_branch
          %524 = sbr.rel (%p522) target = $region52
        $region51: #{tpu_custom_call.1} parent=39 // pred_region
          %526 = vsyncadd %s518, 0
          %s527 = smul.addr %s27, 2
          %s528 = sadd.s32 %s28, %s527
          %s529 = smul.addr %s528, 8
          %s530 = scalar_lea.hbm %s5, %s529
          %s532 = sshll.u32 %s521, 4
          %s533 = int_to_ptr.vmem [resolvable:$true] %s532
          %s534 = sshll.u32 %s530, 4
          %s535 = int_to_ptr.hbm [resolvable:$true] %s534
          %537 = dma.vmem_to_hbm [thread:$0]  %s533, 128, %s535, %s518
        $region52: #{tpu_custom_call.1} parent=39 // pred_fallthru
          _
      $region40: #{tpu_custom_call.1} parent=5 // pred_fallthru
        _
      %p538 = scmp.le.s32.totalorder 2, %s18
      // Predicated region
      $region53: #{tpu_custom_call.1} parent=5 // pred_check
        %p539 = pneg %p538
      $region54: #{tpu_custom_call.1} parent=5 // pred_check_branch
        %541 = sbr.rel (%p539) target = $region56
      $region55: #{tpu_custom_call.1} parent=5 // pred_region
        %s542 = ssub.s32 %s18, 2
        // Predicated region
        $region57: #{tpu_custom_call.1} parent=55 // pred_check
          %p543 = pneg %p173
        $region58: #{tpu_custom_call.1} parent=55 // pred_check_branch
          %545 = sbr.rel (%p543) target = $region60
        $region59: #{tpu_custom_call.1} parent=55 // pred_region
          %s546 = sand.u32 %s158, 1
          %s547 = scalar_lea.sflag [#allocation4], %s546
          %s548 = sand.u32 %s158, 1
          %s549 = smul.addr %s548, 8
          %s550 = scalar_lea.vmem [#allocation7], %s549
          %552 = dma.done %s547, 128
        $region60: #{tpu_custom_call.1} parent=55 // pred_fallthru
          _
      $region56: #{tpu_custom_call.1} parent=5 // pred_fallthru
        _
    $region6: #{tpu_custom_call.1} parent=1 // loop_footer
      %s22 = sadd.s32 1, %s18
    $region7: #{tpu_custom_call.1} parent=1 // loop_footer_branch
      %17 = sbr.rel target = $region3
    $region8: #{tpu_custom_call.1} parent=1 // loop_exit
      _
    %553 = vsyncpa [#allocation3], 1
    %s554 = scalar_lea.sflag [#allocation3], 1
    %555 = vsyncpa %s554, 1
    %556 = vsyncpa [#allocation6], 1
    %557 = vsyncpa [#allocation4], 1
    %s558 = scalar_lea.sflag [#allocation4], 1
    %559 = vsyncpa %s558, 1

</llo_original>
